<compile_context>
chip_gen: v5e
topology: v5e:2x2
jax: 0.10.0
libtpu: 0.0.40
codegen_flags: <defaults>
</compile_context>

<pallas_src>
import functools

import jax
import jax.numpy as jnp
from jax import lax
from jax.experimental import pallas as pl
from jax.experimental.pallas import tpu as pltpu

_MIB = 1024 * 1024
# Per-grid-step VMEM budget used both to gate the fused path and to pick the
# tile size of the two-pass fallback. Conservative across v5e/v6e/v7x.
_STEP_VMEM_BUDGET = 40 * _MIB


def _round_up(v, m):
    return -(-v // m) * m


def _vmem_limit_bytes(footprint):
    """Explicit scoped-VMEM limit: cover the footprint, stay under physical."""
    try:
        cap = pltpu.get_tpu_info().vmem_capacity_bytes
    except Exception:
        cap = 64 * _MIB  # v7x physical (smallest of the three generations)
    return int(min(max(footprint + 8 * _MIB, 32 * _MIB), cap - 8 * _MIB))


def _gram(xv):
    """xv: (C, n) tile -> (C, C) = xv @ xv^T with f32 accumulation on the MXU.

    The implicit RHS transpose rides the XLU slot; no materialized transpose
    of x is needed in HBM or VMEM.
    """
    return lax.dot_general(
        xv, xv, (((1,), (1,)), ((), ())), preferred_element_type=jnp.float32
    )


def _min_softmax(energy, approx_recip):
    """softmax(rowmax(E) - E) == exp(rowmin(E) - E) / rowsum(...)  (fused)."""
    e_min = jnp.min(energy, axis=-1, keepdims=True)
    p = jnp.exp(e_min - energy)
    denom = jnp.sum(p, axis=-1, keepdims=True)
    return p * pl.reciprocal(denom, approx=approx_recip)


# ---------------------------------------------------------------------------
# Fused single-pass kernel: whole (C, N_pad) slab resident in VMEM.
# ---------------------------------------------------------------------------
def _cam_fused_kernel(gamma_ref, x_ref, o_ref, *, approx_recip):
    xv = x_ref[0]                                     # (C, n_pad), input dtype
    att = _min_softmax(_gram(xv), approx_recip)       # (C, C), f32
    out = jnp.dot(att.astype(xv.dtype), xv, preferred_element_type=jnp.float32)
    o_ref[0] = (gamma_ref[0] * out + xv.astype(jnp.float32)).astype(o_ref.dtype)


# ---------------------------------------------------------------------------
# Two-pass fallback: (1) accumulate energy over N tiles + finalize softmax,
#                    (2) apply attention tile-by-tile (fully parallel grid).
# ---------------------------------------------------------------------------
def _cam_attention_kernel(x_ref, att_ref, energy_acc, *, approx_recip):
    n = pl.program_id(1)

    @pl.when(n == 0)
    def _():
        energy_acc[...] = jnp.zeros_like(energy_acc)

    energy_acc[...] += _gram(x_ref[0])                # (C, tn) self-contraction

    @pl.when(n == pl.num_programs(1) - 1)
    def _():
        att_ref[0] = _min_softmax(energy_acc[...], approx_recip).astype(
            att_ref.dtype
        )


def _cam_apply_kernel(gamma_ref, att_ref, x_ref, o_ref):
    xv = x_ref[0]                                     # (C, tn), input dtype
    out = jnp.dot(att_ref[0], xv, preferred_element_type=jnp.float32)
    o_ref[0] = (gamma_ref[0] * out + xv.astype(jnp.float32)).astype(o_ref.dtype)


@functools.partial(jax.jit, static_argnames=("force_two_pass",))
def cam_module(x, gamma, force_two_pass=False):
    """x: (B, C, H, W) float array, gamma: shape-(1,) float32 parameter."""
    B, C, H, W = x.shape
    N = H * W
    dtype = x.dtype
    itemsize = x.dtype.itemsize
    # Exact reciprocal for f32 parity; EUP approx reciprocal on the bf16 path.
    approx_recip = bool(dtype == jnp.bfloat16)

    x_flat = x.reshape(B, C, N)
    n128 = _round_up(N, 128)

    # Fused-path per-step VMEM: x slab (2 bufs) + out slab (2 bufs) +
    # f32 intermediates (energy/p/att) + margin.
    fused_step = 4 * C * n128 * itemsize + 3 * C * C * 4 + 2 * _MIB

    if (not force_two_pass) and fused_step <= _STEP_VMEM_BUDGET:
        # ------------------- fused single-pass path -------------------
        n_pad = n128
        if n_pad != N:
            # Zero padding is exact: zero columns contribute nothing to the
            # Gram matrix, and padded output columns are sliced away below.
            x_flat = jnp.pad(x_flat, ((0, 0), (0, 0), (0, n_pad - N)))

        out_flat = pl.pallas_call(
            functools.partial(_cam_fused_kernel, approx_recip=approx_recip),
            out_shape=jax.ShapeDtypeStruct((B, C, n_pad), dtype),
            grid_spec=pltpu.PrefetchScalarGridSpec(
                num_scalar_prefetch=0,
                grid=(B,),
                in_specs=[
                    pl.BlockSpec(memory_space=pltpu.MemorySpace.SMEM),  # gamma
                    pl.BlockSpec((1, C, n_pad), lambda b: (b, 0, 0)),   # x slab
                ],
                out_specs=pl.BlockSpec((1, C, n_pad), lambda b: (b, 0, 0)),
            ),
            compiler_params=pltpu.CompilerParams(
                dimension_semantics=("parallel",),
                vmem_limit_bytes=_vmem_limit_bytes(fused_step),
            ),
        )(gamma, x_flat)
    else:
        # ------------------- two-pass fallback path -------------------
        # Pick tn first (1024 preferred), then pad N up to a multiple of tn.
        tn = 128
        for cand in (1024, 512, 256, 128):
            step = (
                4 * C * cand * itemsize        # x in (2 bufs) + out (2 bufs)
                + 2 * C * C * itemsize         # attention double buffer
                + C * C * 4                    # f32 energy scratch
                + 2 * _MIB
            )
            if step <= _STEP_VMEM_BUDGET:
                tn = cand
                break
        # TODO(synk): for very large C (e.g. >= 2048 in f32) row-tile the Gram
        # output (grid (B, C//tc, num_n)) to shrink the f32 scratch on v7x and
        # expose a parallel axis when B is small.
        tn = min(tn, n128)
        n_pad = _round_up(N, tn)
        num_n = n_pad // tn
        if n_pad != N:
            x_flat = jnp.pad(x_flat, ((0, 0), (0, 0), (0, n_pad - N)))

        attn_step = (
            2 * C * tn * itemsize + 2 * C * C * itemsize + 4 * C * C * 4 + 2 * _MIB
        )
        apply_step = (
            4 * C * tn * itemsize + 2 * C * C * itemsize + C * tn * 4 + 2 * _MIB
        )

        attention = pl.pallas_call(
            functools.partial(_cam_attention_kernel, approx_recip=approx_recip),
            out_shape=jax.ShapeDtypeStruct((B, C, C), dtype),
            grid_spec=pltpu.PrefetchScalarGridSpec(
                num_scalar_prefetch=0,
                grid=(B, num_n),
                in_specs=[
                    pl.BlockSpec((1, C, tn), lambda b, n: (b, 0, n)),   # x tile
                ],
                out_specs=pl.BlockSpec((1, C, C), lambda b, n: (b, 0, 0)),
                scratch_shapes=[pltpu.VMEM((C, C), jnp.float32)],
            ),
            compiler_params=pltpu.CompilerParams(
                dimension_semantics=("parallel", "arbitrary"),
                vmem_limit_bytes=_vmem_limit_bytes(attn_step),
            ),
        )(x_flat)

        out_flat = pl.pallas_call(
            _cam_apply_kernel,
            out_shape=jax.ShapeDtypeStruct((B, C, n_pad), dtype),
            grid_spec=pltpu.PrefetchScalarGridSpec(
                num_scalar_prefetch=0,
                grid=(B, num_n),
                in_specs=[
                    pl.BlockSpec(memory_space=pltpu.MemorySpace.SMEM),  # gamma
                    pl.BlockSpec((1, C, C), lambda b, n: (b, 0, 0)),    # attention
                    pl.BlockSpec((1, C, tn), lambda b, n: (b, 0, n)),   # x tile
                ],
                out_specs=pl.BlockSpec((1, C, tn), lambda b, n: (b, 0, n)),
            ),
            compiler_params=pltpu.CompilerParams(
                dimension_semantics=("parallel", "parallel"),
                vmem_limit_bytes=_vmem_limit_bytes(apply_step),
            ),
        )(gamma, attention, x_flat)

    if n_pad != N:
        out_flat = out_flat[:, :, :N]
    return out_flat.reshape(B, C, H, W)


def _reference(x, gamma, emulate_matmul_dtype=None):
    """Pure-JAX reference mirroring the PyTorch forward (f32 math).

    If emulate_matmul_dtype is set, matmul operands are rounded to that dtype
    first (a bf16*bf16 product is exact in f32, so this reproduces the
    kernel's bf16-operand / f32-accumulate MXU path up to summation order).
    """
    B, C, H, W = x.shape
    xf = x.reshape(B, C, -1).astype(jnp.float32)
    q = xf
    if emulate_matmul_dtype is not None:
        q = xf.astype(emulate_matmul_dtype).astype(jnp.float32)
    energy = jnp.einsum("bcn,bdn->bcd", q, q)
    energy_new = jnp.max(energy, axis=-1, keepdims=True) - energy
    attention = jax.nn.softmax(energy_new, axis=-1)
    if emulate_matmul_dtype is not None:
        attention = attention.astype(emulate_matmul_dtype).astype(jnp.float32)
    out = jnp.einsum("bcd,bdn->bcn", attention, q)
    out = gamma[0] * out + xf
    return out.reshape(B, C, H, W)


if __name__ == "__main__":
    key = jax.random.PRNGKey(0)
    gamma_zero = jnp.zeros((1,), dtype=jnp.float32)
    gamma_test = jnp.array([0.5], dtype=jnp.float32)

    # (shape, dtype) configs: fused path, padded-N (H*W not multiple of 128),
    # bf16 MXU fast path, and a larger-N case that exercises the two-pass
    # multi-tile accumulation when forced.
    configs = [
        ((2, 4, 16, 16), jnp.float32),
        ((2, 4, 32, 32), jnp.float32),
        ((1, 8, 10, 10), jnp.float32),
        ((2, 4, 16, 16), jnp.bfloat16),
        ((1, 8, 32, 48), jnp.float32),
    ]

    for idx, (shape, dtype) in enumerate(configs):
        k = jax.random.fold_in(key, idx)
        # Snap inputs to the bf16 grid so the Gram matrix is insensitive to the
        # MXU's operand-rounding strategy (kernel and reference then differ
        # only in f32 summation order).
        x = (
            jax.random.normal(k, shape, dtype=jnp.float32)
            .astype(jnp.bfloat16)
            .astype(dtype)
        )

        for gamma in (gamma_zero, gamma_test):
            for force_two_pass in (False, True):
                out = jax.block_until_ready(
                    cam_module(x, gamma, force_two_pass=force_two_pass)
                )
                if dtype == jnp.bfloat16:
                    ref = _reference(x, gamma, emulate_matmul_dtype=jnp.bfloat16)
                    atol = rtol = 5e-2  # final bf16 store + approx reciprocal
                else:
                    ref = _reference(x, gamma)
                    atol = rtol = 2e-2  # tiled summation order / MXU defaults
                ok = jnp.allclose(
                    out.astype(jnp.float32), ref, atol=atol, rtol=rtol
                )
                assert ok, (
                    f"mismatch for shape={shape} dtype={dtype} "
                    f"gamma={gamma} two_pass={force_two_pass}"
                )

    print("KERNEL_OK")
</pallas_src>

<mosaic_0001>
module attributes {stable_mosaic.version = 11 : i64} {
  func.func @_cam_fused_kernel(%arg0: i32, %arg1: memref<1xf32, #tpu.memory_space<smem>>, %arg2: memref<1x4x256xf32, #tpu.memory_space<vmem>>, %arg3: memref<1x4x256xf32, #tpu.memory_space<vmem>>) attributes {dimension_semantics = [#tpu.dimension_semantics<parallel>], iteration_bounds = array<i64: 2>, scalar_prefetch = 0 : i64, scratch_operands = 0 : i64, tpu.core_type = #tpu.core_type<tc>, window_params = [{transform_indices = @transform_0, window_bounds = array<i64: 1>}, {transform_indices = @transform_1, window_bounds = array<i64: 1, 4, 256>}, {transform_indices = @transform_2, window_bounds = array<i64: 1, 4, 256>}]} {
    %c0 = arith.constant 0 : index
    %c0_0 = arith.constant 0 : index
    %c0_1 = arith.constant 0 : index
    %0 = vector.load %arg2[%c0, %c0_0, %c0_1] : memref<1x4x256xf32, #tpu.memory_space<vmem>>, vector<1x4x256xf32>
    %1 = vector.shape_cast %0 : vector<1x4x256xf32> to vector<4x256xf32>
    %cst = arith.constant dense<0.000000e+00> : vector<4x4xf32>
    %2 = tpu.matmul %1, %1, %cst {dimension_numbers = #tpu.dot_dimension_numbers<[1], [1], [0], [0], [0, 0, 1, 0], [], []>} : vector<4x256xf32>, vector<4x256xf32>, vector<4x4xf32> -> vector<4x4xf32>
    %cst_2 = arith.constant dense<0x7F800000> : vector<4xf32>
    %3 = vector.multi_reduction <minimumf>, %2, %cst_2 [1] : vector<4x4xf32> to vector<4xf32>
    %4 = vector.shape_cast %3 : vector<4xf32> to vector<4x1xf32>
    %5 = vector.broadcast %4 : vector<4x1xf32> to vector<4x4xf32>
    %6 = arith.subf %5, %2 : vector<4x4xf32>
    %7 = math.exp %6 : vector<4x4xf32>
    %cst_3 = arith.constant dense<0.000000e+00> : vector<4xf32>
    %8 = vector.multi_reduction <add>, %7, %cst_3 [1] : vector<4x4xf32> to vector<4xf32>
    %9 = vector.shape_cast %8 : vector<4xf32> to vector<4x1xf32>
    %10 = tpu.reciprocal %9 : vector<4x1xf32> -> vector<4x1xf32>
    %11 = vector.broadcast %10 : vector<4x1xf32> to vector<4x4xf32>
    %12 = arith.mulf %7, %11 : vector<4x4xf32>
    %cst_4 = arith.constant dense<0.000000e+00> : vector<4x256xf32>
    %13 = tpu.matmul %12, %1, %cst_4 {dimension_numbers = #tpu.dot_dimension_numbers<[1], [0], [0], [1], [0, 0, 1, 1], [], []>} : vector<4x4xf32>, vector<4x256xf32>, vector<4x256xf32> -> vector<4x256xf32>
    %c0_5 = arith.constant 0 : index
    %14 = memref.load %arg1[%c0_5] : memref<1xf32, #tpu.memory_space<smem>>
    %15 = vector.broadcast %14 : f32 to vector<4x256xf32>
    %16 = arith.mulf %15, %13 : vector<4x256xf32>
    %17 = arith.addf %16, %1 : vector<4x256xf32>
    %c0_6 = arith.constant 0 : index
    %c0_7 = arith.constant 0 : index
    %c0_8 = arith.constant 0 : index
    %18 = vector.load %arg3[%c0_6, %c0_7, %c0_8] : memref<1x4x256xf32, #tpu.memory_space<vmem>>, vector<1x4x256xf32>
    %19 = vector.shape_cast %18 : vector<1x4x256xf32> to vector<4x256xf32>
    %20 = vector.shape_cast %17 : vector<4x256xf32> to vector<1x4x256xf32>
    tpu.vector_store %arg3[%c0_6, %c0_7, %c0_8], %20 {strides = array<i32>} : memref<1x4x256xf32, #tpu.memory_space<vmem>>, vector<1x4x256xf32>,
    return
  }
  func.func @transform_0(%arg0: i32) -> i32 {
    %c0_i32 = arith.constant 0 : i32
    %c0_i32_0 = arith.constant 0 : i32
    return %c0_i32 : i32
  }
  func.func @transform_1(%arg0: i32) -> (i32, i32, i32) {
    %c0_i32 = arith.constant 0 : i32
    %c0_i32_0 = arith.constant 0 : i32
    %c0_i32_1 = arith.constant 0 : i32
    return %arg0, %c0_i32, %c0_i32_0 : i32, i32, i32
  }
  func.func @transform_2(%arg0: i32) -> (i32, i32, i32) {
    %c0_i32 = arith.constant 0 : i32
    %c0_i32_0 = arith.constant 0 : i32
    %c0_i32_1 = arith.constant 0 : i32
    return %arg0, %c0_i32, %c0_i32_0 : i32, i32, i32
  }
}

</mosaic_0001>

<llo_original>
// kernel: cam_module.1
$region0: #{cam_module.1}
  #allocation0 [shape = 'u32[]', space=smem, size = 0x4, offset = 0x4, fixed_abs, tag = 'smem constant byte address 0x4 - core index']
  #allocation1 [shape = 'u32[72,128]{1,0:T(1,128)}', space=vmem, size = 0x9000, scoped, tag = 'internal scratch']
  #allocation2 [shape = 'f32[1]{0:T(128)S(6)}', space=smem, size = 0x200, scoped, tag = 'scoped memory for cam_module.1']
  %s0 = inlined_call_operand.<no memory space> [shape: f32[1], index: 0, kind: input, shape index: {}]
  %s1 = inlined_call_operand.vmem [shape: f32[2,4,256], index: 1, kind: input, shape index: {}]
  %s2 = inlined_call_operand.vmem [shape: f32[2,4,256], index: 2, kind: output, shape index: {}]
  %s3 = sld [smem:[#allocation0]]
  $region41: #{cam_module.1} parent=0
    _
  %s5 = ssub.s32 1, %s3
  %s6 = scalar_select 0, %s5, %s3
  %7 = sst [smem:[#allocation2]] %s0
  loop: start=0, step=1, limit=4
  $region2: #{cam_module.1} parent=0 // loop_pre_header
    _
  $region3: #{cam_module.1} parent=0 // loop_header
    %s9 = sphi 0, %s13
    %p10 = scmp.ge.s32.totalorder %s9, 4
    %s17 = sphi 0, %s17
    %s19 = sphi 0, %s17
    %s20 = sphi 0, %s19
    %s34 = sphi 0, %s20
    %s40 = sphi 0, %s42
    %s43 = sphi 0, %s40
    %s44 = sphi 0, %s43
    %s60 = sphi 0, %s44
    %s66 = sphi 0, %s68
    %s69 = sphi 0, %s66
    %s70 = sphi 0, %s69
    %s86 = sphi 0, %s70
  $region4: #{cam_module.1} parent=0 // loop_header_branch
    %12 = sbr.rel (%p10) target = $region8
  $region5: #{cam_module.1} parent=0 // loop_body
    %s14 = ssub.s32 %s9, 1
    %s15 = ssub.s32 %s9, 2
    %s16 = sadd.s32 %s9, 1
    %s18 = sadd.s32 %s17, 1
    %p21 = scmp.eq.s32.totalorder %s9, 1
    %p22 = scmp.ne.s32.totalorder %s17, %s19
    %p23 = scmp.eq.s32.totalorder %s9, 0
    %p24 = por %p22, %p23
    %p25 = scmp.ne.s32.totalorder %s17, %s19
    %p26 = scmp.eq.s32.totalorder %s14, 1
    %p27 = por %p25, %p26
    %p28 = scmp.ne.s32.totalorder %s19, %s20
    %p29 = scmp.eq.s32.totalorder %s14, 0
    %p30 = por %p28, %p29
    %p31 = scmp.ne.s32.totalorder %s19, %s20
    %p32 = scmp.eq.s32.totalorder %s15, 1
    %p33 = por %p31, %p32
    %p35 = scmp.ne.s32.totalorder %s20, %s34
    %p36 = scmp.eq.s32.totalorder %s15, 0
    %p37 = por %p35, %p36
    %s38 = ssub.s32 %s9, %s16
    %p39 = scmp.eq.s32.totalorder %s38, 0
    %s41 = sadd.s32 %s40, 1
    %s42 = scalar_select %p39, %s40, %s41
    %p45 = pneg %p39
    %p46 = scmp.eq.s32.totalorder %s9, 1
    %p47 = por %p45, %p46
    %p48 = scmp.ne.s32.totalorder %s40, %s43
    %p49 = scmp.eq.s32.totalorder %s9, 0
    %p50 = por %p48, %p49
    %p51 = scmp.ne.s32.totalorder %s40, %s43
    %p52 = scmp.eq.s32.totalorder %s14, 1
    %p53 = por %p51, %p52
    %p54 = scmp.ne.s32.totalorder %s43, %s44
    %p55 = scmp.eq.s32.totalorder %s14, 0
    %p56 = por %p54, %p55
    %p57 = scmp.ne.s32.totalorder %s43, %s44
    %p58 = scmp.eq.s32.totalorder %s15, 1
    %p59 = por %p57, %p58
    %p61 = scmp.ne.s32.totalorder %s44, %s60
    %p62 = scmp.eq.s32.totalorder %s15, 0
    %p63 = por %p61, %p62
    %s64 = ssub.s32 %s9, %s16
    %p65 = scmp.eq.s32.totalorder %s64, 0
    %s67 = sadd.s32 %s66, 1
    %s68 = scalar_select %p65, %s66, %s67
    %p71 = pneg %p65
    %p72 = scmp.eq.s32.totalorder %s9, 1
    %p73 = por %p71, %p72
    %p74 = scmp.ne.s32.totalorder %s66, %s69
    %p75 = scmp.eq.s32.totalorder %s9, 0
    %p76 = por %p74, %p75
    %p77 = scmp.ne.s32.totalorder %s66, %s69
    %p78 = scmp.eq.s32.totalorder %s14, 1
    %p79 = por %p77, %p78
    %p80 = scmp.ne.s32.totalorder %s69, %s70
    %p81 = scmp.eq.s32.totalorder %s14, 0
    %p82 = por %p80, %p81
    %p83 = scmp.ne.s32.totalorder %s69, %s70
    %p84 = scmp.eq.s32.totalorder %s15, 1
    %p85 = por %p83, %p84
    %p87 = scmp.ne.s32.totalorder %s70, %s86
    %p88 = scmp.eq.s32.totalorder %s15, 0
    %p89 = por %p87, %p88
    %p90 = scmp.le.s32.totalorder 1, %s9
    %p91 = scmp.lt.s32.totalorder %s9, 3
    %p92 = pnand %p90, %p91
    %p93 = pneg %p92
    // Predicated region
    $region9: #{cam_module.1} parent=5 // pred_check
      _
    $region10: #{cam_module.1} parent=5 // pred_check_branch
      %95 = sbr.rel (%p92) target = $region12
    $region11: #{cam_module.1} parent=5 // pred_region
      %s96 = ssub.s32 %s9, 1
      // Predicated region
      $region13: #{cam_module.1} parent=11 // pred_check
        %p97 = pneg %p30
      $region14: #{cam_module.1} parent=11 // pred_check_branch
        %99 = sbr.rel (%p97) target = $region16
      $region15: #{cam_module.1} parent=11 // pred_region
        _
      $region16: #{cam_module.1} parent=11 // pred_fallthru
        _
    $region12: #{cam_module.1} parent=5 // pred_fallthru
      _
    %p100 = scmp.lt.s32.totalorder %s9, 2
    // Predicated region
    $region17: #{cam_module.1} parent=5 // pred_check
      %p101 = pneg %p100
    $region18: #{cam_module.1} parent=5 // pred_check_branch
      %103 = sbr.rel (%p101) target = $region20
    $region19: #{cam_module.1} parent=5 // pred_region
      // Predicated region
      $region21: #{cam_module.1} parent=19 // pred_check
        %p104 = pneg %p50
      $region22: #{cam_module.1} parent=19 // pred_check_branch
        %106 = sbr.rel (%p104) target = $region24
      $region23: #{cam_module.1} parent=19 // pred_region
        %p107 = scmp.lt.s32.totalorder %s9, 1
        %s108 = scalar_select %p107, %s9, 1
        %s109 = smul.addr %s108, 2
        %s110 = smul.addr %s109, 4
        %s111 = scalar_lea.vmem %s1, %s110
      $region24: #{cam_module.1} parent=19 // pred_fallthru
        _
    $region20: #{cam_module.1} parent=5 // pred_fallthru
      _
    %p112 = scmp.le.s32.totalorder 1, %s9
    %p113 = scmp.lt.s32.totalorder %s9, 3
    %p114 = pnand %p112, %p113
    %p115 = pneg %p114
    // Predicated region
    $region25: #{cam_module.1} parent=5 // pred_check
      _
    $region26: #{cam_module.1} parent=5 // pred_check_branch
      %117 = sbr.rel (%p114) target = $region28
    $region27: #{cam_module.1} parent=5 // pred_region
      %s118 = ssub.s32 %s9, 1
      %p119 = pneg %p30
      %p120 = pneg %p27
      %p121 = scmp.lt.s32.totalorder %s14, 1
      %s122 = scalar_select %p121, %s14, 1
      %s123 = smul.addr %s122, 2
      %s124 = smul.addr %s123, 4
      %s125 = scalar_lea.vmem %s1, %s124
      %p126 = pneg %p56
      %p127 = pneg %p53
      %p128 = pneg %p82
      %p129 = pneg %p79
      %p130 = scmp.lt.s32.totalorder %s14, 1
      %s131 = scalar_select %p130, %s14, 1
      %s132 = smul.addr %s131, 2
      %s133 = smul.addr %s132, 4
      %s134 = scalar_lea.vmem %s2, %s133
      %p135 = scmp.lt.s32.totalorder %s14, 1
      %s136 = scalar_select %p135, %s14, 1
      %s137 = smul.addr %s136, 2
      %s138 = smul.addr %s137, 4
      %s139 = scalar_lea.vmem %s1, %s138
      %p140 = scmp.lt.s32.totalorder %s14, 1
      %s141 = scalar_select %p140, %s14, 1
      %s142 = smul.addr %s141, 2
      %s143 = smul.addr %s142, 4
      %s144 = scalar_lea.vmem %s2, %s143
      %v145 = vld [vmem:[%s139] sm:$0xff]
      %147 = vst [vmem:[#allocation1] ss:$2 sm:$0xff] %v145
      %v148 = vld.sshfl [vmem:[#allocation1] sm:$0xff pattern:$0x75316420]
      %v149 = vld.sshfl [vmem:[#allocation1 + $0x8] sm:$0xff pattern:$0x75316420]
      %152 = vst [vmem:[#allocation1] ss:$2 sm:$0xff] %v145
      %v153 = vld.sshfl [vmem:[#allocation1] sm:$0xff pattern:$0x75316420]
      %v154 = vld.sshfl [vmem:[#allocation1 + $0x8] sm:$0xff pattern:$0x75316420]
      %157 = vmatpush.xpose.msra.mxu0 0.0
      %158 = vmatpush.xpose.msra.mxu0 0.0
      %159 = vmatpush.xpose.msra.mxu0 0.0
      %160 = vmatpush.xpose.msra.mxu0 0.0
      %161 = vmatpush.xpose.msra.mxu0 0.0
      %162 = vmatpush.xpose.msra.mxu0 0.0
      %163 = vmatpush.xpose.msra.mxu0 0.0
      %164 = vmatpush.xpose.msra.mxu0 0.0
      %165 = vmatpush.xpose.msra.mxu0 0.0
      %166 = vmatpush.xpose.msra.mxu0 0.0
      %167 = vmatpush.xpose.msra.mxu0 0.0
      %168 = vmatpush.xpose.msra.mxu0 0.0
      %169 = vmatpush.xpose.msra.mxu0 0.0
      %170 = vmatpush.xpose.msra.mxu0 0.0
      %171 = vmatpush.xpose.msra.mxu0 0.0
      %172 = vmatpush.xpose.msra.mxu0 %v153
      %173 = vmatmul.f32.gmra.mxu0 %v148
      %v174 = vpop.f32.mrf.mxu0
      %v175 = vadd.f32 0.0, %v174
      %176 = vdwg.mxu0
      %177 = vmatpush.xpose.msra.mxu0 0.0
      %178 = vmatpush.xpose.msra.mxu0 0.0
      %179 = vmatpush.xpose.msra.mxu0 0.0
      %180 = vmatpush.xpose.msra.mxu0 0.0
      %181 = vmatpush.xpose.msra.mxu0 0.0
      %182 = vmatpush.xpose.msra.mxu0 0.0
      %183 = vmatpush.xpose.msra.mxu0 0.0
      %184 = vmatpush.xpose.msra.mxu0 0.0
      %185 = vmatpush.xpose.msra.mxu0 0.0
      %186 = vmatpush.xpose.msra.mxu0 0.0
      %187 = vmatpush.xpose.msra.mxu0 0.0
      %188 = vmatpush.xpose.msra.mxu0 0.0
      %189 = vmatpush.xpose.msra.mxu0 0.0
      %190 = vmatpush.xpose.msra.mxu0 0.0
      %191 = vmatpush.xpose.msra.mxu0 0.0
      %192 = vmatpush.xpose.msra.mxu0 %v154
      %193 = vmatmul.f32.gmra.mxu0 %v149
      %v194 = vpop.f32.mrf.mxu0
      %v195 = vadd.f32 %v175, %v194
      %196 = vdwg.mxu0
      %vm197 = vcmask 27648
      %v198 = vsel %vm197, %v195, inf
      %199 = vmin.xlane.f32.xlu0 %v198
      %v200 = vpop.xlane.xlu0 %199
      %v201 = vsub.f32 %v200, %v195
      %v202 = vmul.f32 %v201, 1.442695
      %v203 = vpow.pop %v202
      %v204 = vsel %vm197, %v203, 0.0
      %205 = vadd.xlane.f32.xlu0 %v204
      %v206 = vpop.xlane.xlu0 %205
      %v207 = vrcp.pop %v206
      %v208 = vmul.f32 %v206, %v207
      %v209 = vsub.f32 1.0, %v208
      %v210 = vmul.f32 %v207, %v209
      %v211 = vadd.f32 %v207, %v210
      %vm212 = vweird.f32 %v206
      %vm213 = vweird.f32 %v207
      %vm214 = vmor %vm212, %vm213
      %v215 = vsel %vm214, %v207, %v211
      %v216 = vand.u32 2147483647, %v206
      %vm217 = vcmp.eq.f32.partialorder %v216, 8.507059e+37
      %v218 = vand.u32 %v206, 2147483648
      %v219 = vor.u32 1.1754944e-38, %v218
      %v220 = vsel %vm217, %v219, %v215
      %v221 = vmul.f32 %v203, %v220
      %222 = vst [vmem:[#allocation1] ss:$2 sm:$0xff] %v145
      %v223 = vld.sshfl [vmem:[#allocation1] sm:$0xff pattern:$0x75316420]
      %v224 = vld.sshfl [vmem:[#allocation1 + $0x8] sm:$0xff pattern:$0x75316420]
      %vm225 = vcmask 31744
      %v227 = vsel %vm225, %v221, 0
      %vm229 = vcmask 1043456
      %v230 = vsel %vm229, %v223, 0
      %v232 = vsel %vm229, %v224, 0
      %234 = vmatpush.msra.mxu0 0.0
      %235 = vmatpush.msra.mxu0 0.0
      %236 = vmatpush.msra.mxu0 0.0
      %237 = vmatpush.msra.mxu0 0.0
      %238 = vmatpush.msra.mxu0 0.0
      %239 = vmatpush.msra.mxu0 0.0
      %240 = vmatpush.msra.mxu0 0.0
      %241 = vmatpush.msra.mxu0 0.0
      %242 = vmatpush.msra.mxu0 0.0
      %243 = vmatpush.msra.mxu0 0.0
      %244 = vmatpush.msra.mxu0 0.0
      %245 = vmatpush.msra.mxu0 0.0
      %246 = vmatpush.msra.mxu0 0.0
      %247 = vmatpush.msra.mxu0 0.0
      %248 = vmatpush.msra.mxu0 0.0
      %249 = vmatpush.msra.mxu0 %v230
      %250 = vmatmul.f32.gmra.mxu0 %v227
      %v251 = vpop.f32.mrf.mxu0
      %v252 = vadd.f32 0.0, %v251
      %253 = vdwg.mxu0
      %254 = vmatpush.msra.mxu0 0.0
      %255 = vmatpush.msra.mxu0 0.0
      %256 = vmatpush.msra.mxu0 0.0
      %257 = vmatpush.msra.mxu0 0.0
      %258 = vmatpush.msra.mxu0 0.0
      %259 = vmatpush.msra.mxu0 0.0
      %260 = vmatpush.msra.mxu0 0.0
      %261 = vmatpush.msra.mxu0 0.0
      %262 = vmatpush.msra.mxu0 0.0
      %263 = vmatpush.msra.mxu0 0.0
      %264 = vmatpush.msra.mxu0 0.0
      %265 = vmatpush.msra.mxu0 0.0
      %266 = vmatpush.msra.mxu0 0.0
      %267 = vmatpush.msra.mxu0 0.0
      %268 = vmatpush.msra.mxu0 0.0
      %269 = vmatpush.msra.mxu0 %v232
      %270 = vmatmul.f32.gmra.mxu0 %v227
      %v271 = vpop.f32.mrf.mxu0
      %v272 = vadd.f32 0.0, %v271
      %273 = vdwg.mxu0
      %s274 = sld [smem:[#allocation2]]
      %v275 = vstv %s274
      %v276 = vmul.f32 %v275, %v252
      %v277 = vmul.f32 %v275, %v272
      %278 = vst [vmem:[#allocation1] ss:$2 sm:$0xff] %v145
      %v279 = vld.sshfl [vmem:[#allocation1] sm:$0xff pattern:$0x75316420]
      %v280 = vld.sshfl [vmem:[#allocation1 + $0x8] sm:$0xff pattern:$0x75316420]
      %v283 = vadd.f32 %v276, %v279
      %v284 = vadd.f32 %v277, %v280
      %v287 = vrot.slane %v284, 4
      %v288 = vsel %vm229, %v283, %v287
      %290 = vst [vmem:[%s144] sm:$0xff] %v288
      %p291 = scmp.lt.s32.totalorder %s14, 1
      %s292 = scalar_select %p291, %s14, 1
      %s293 = smul.addr %s292, 2
      %s294 = smul.addr %s293, 4
      %s295 = scalar_lea.vmem %s2, %s294
      // Predicated region
      $region29: #{cam_module.1} parent=27 // pred_check
        %p296 = pneg %p79
      $region30: #{cam_module.1} parent=27 // pred_check_branch
        %298 = sbr.rel (%p296) target = $region32
      $region31: #{cam_module.1} parent=27 // pred_region
        _
      $region32: #{cam_module.1} parent=27 // pred_fallthru
        _
    $region28: #{cam_module.1} parent=5 // pred_fallthru
      _
    %p299 = scmp.le.s32.totalorder 2, %s9
    // Predicated region
    $region33: #{cam_module.1} parent=5 // pred_check
      %p300 = pneg %p299
    $region34: #{cam_module.1} parent=5 // pred_check_branch
      %302 = sbr.rel (%p300) target = $region36
    $region35: #{cam_module.1} parent=5 // pred_region
      %s303 = ssub.s32 %s9, 2
      // Predicated region
      $region37: #{cam_module.1} parent=35 // pred_check
        %p304 = pneg %p85
      $region38: #{cam_module.1} parent=35 // pred_check_branch
        %306 = sbr.rel (%p304) target = $region40
      $region39: #{cam_module.1} parent=35 // pred_region
        %p307 = scmp.lt.s32.totalorder %s15, 1
        %s308 = scalar_select %p307, %s15, 1
        %s309 = smul.addr %s308, 2
        %s310 = smul.addr %s309, 4
        %s311 = scalar_lea.vmem %s2, %s310
      $region40: #{cam_module.1} parent=35 // pred_fallthru
        _
    $region36: #{cam_module.1} parent=5 // pred_fallthru
      _
  $region6: #{cam_module.1} parent=0 // loop_footer
    %s13 = sadd.s32 1, %s9
  $region7: #{cam_module.1} parent=0 // loop_footer_branch
    %8 = sbr.rel target = $region3
  $region8: #{cam_module.1} parent=0 // loop_exit
    _

</llo_original>
